<compile_context>
chip_gen: v7x
topology: tpu7x:2x2x1
jax: 0.10.0
libtpu: 0.0.40
codegen_flags: <defaults>
</compile_context>

<pallas_src>
import functools

import jax
import jax.numpy as jnp
import numpy as np
from jax.experimental import pallas as pl
from jax.experimental.pallas import tpu as pltpu

NUM_LABELS = 9
NUM_LABEL = NUM_LABELS + 1  # num_label = num_labels + 1


def _span_loss_kernel(logits_ref, labels_ref, mask_ref, out_ref, *, n_valid, tn):
    i = pl.program_id(0)

    logits = logits_ref[...].astype(jnp.float32)   # (C, TN)  classes on sublanes
    labels = labels_ref[...].astype(jnp.int32)     # (1, TN)
    mask = mask_ref[...].astype(jnp.float32)       # (1, TN)
    c = logits.shape[0]

    # Column validity (handles the ragged last tile without any wrapper-side pad;
    # also protects against garbage in the out-of-bounds block region).
    col = jax.lax.broadcasted_iota(jnp.int32, (1, tn), 1) + i * tn
    valid = col < n_valid

    # Numerically stable cross-entropy; class reductions run over the sublane axis.
    row_max = jnp.max(logits, axis=0, keepdims=True)                        # (1, TN)
    lse = jnp.log(jnp.sum(jnp.exp(logits - row_max), axis=0,
                          keepdims=True)) + row_max                          # (1, TN)
    class_ids = jax.lax.broadcasted_iota(jnp.int32, (c, tn), 0)             # (C, TN)
    onehot = (class_ids == labels).astype(jnp.float32)                      # (C, TN)
    picked = jnp.sum(logits * onehot, axis=0, keepdims=True)                # (1, TN)
    ce = lse - picked                                                       # (1, TN)

    contrib = jnp.where(valid, ce * mask, 0.0)                              # (1, TN)

    # Fold TN lanes into 128 accumulation bins with lane-aligned static slices:
    # pure VPU adds, no per-step cross-lane XLU reduce, no 1-lane masked store.
    partial = contrib[:, 0:128]
    for g in range(1, tn // 128):
        partial = partial + contrib[:, g * 128:(g + 1) * 128]
    out_ref[...] = partial.reshape(1, 1, 128)                               # lane-dense write


@functools.partial(jax.jit, static_argnames=("tn",))
def span_loss(span_logits, span_label, seq_mask, *, tn=8192):
    """span_logits: (B, S, S, C); span_label: (B, S, S) int; seq_mask: (B, S, S)."""
    c = span_logits.shape[-1]
    batch = seq_mask.shape[0]                      # torch: seq_mask.size()[0]
    n = int(np.prod(span_label.shape))             # B*S*S rows

    # Class-major layout: classes on sublanes, rows on lanes.  The transpose is a
    # one-time XLA layout copy; logits/mask keep their native dtype (bf16 OK).
    logits_t = jnp.moveaxis(span_logits, -1, 0).reshape(c, -1)   # (C, N)
    labels = span_label.reshape(1, -1)                           # (1, N)
    mask = seq_mask.reshape(1, -1)                               # (1, N)

    tn = max(128, (int(tn) // 128) * 128)          # keep tile a multiple of 128
    n_pad128 = ((n + 127) // 128) * 128
    tn_eff = min(tn, n_pad128)                     # don't over-allocate for tiny N
    num_tiles = (n + tn_eff - 1) // tn_eff

    partials = pl.pallas_call(
        functools.partial(_span_loss_kernel, n_valid=n, tn=tn_eff),
        out_shape=jax.ShapeDtypeStruct((num_tiles, 1, 128), jnp.float32),
        grid_spec=pltpu.PrefetchScalarGridSpec(
            num_scalar_prefetch=0,
            grid=(num_tiles,),
            in_specs=[
                pl.BlockSpec((c, tn_eff), lambda i: (0, i)),
                pl.BlockSpec((1, tn_eff), lambda i: (0, i)),
                pl.BlockSpec((1, tn_eff), lambda i: (0, i)),
            ],
            out_specs=pl.BlockSpec((1, 1, 128), lambda i: (i, 0, 0)),
        ),
        compiler_params=pltpu.CompilerParams(
            dimension_semantics=("parallel",)),    # no carried state -> OK on v7x 2-TC
    )(logits_t, labels, mask)

    return jnp.sum(partials) / batch


def _reference(span_logits, span_label, seq_mask):
    c = span_logits.shape[-1]
    logits = span_logits.reshape(-1, c).astype(jnp.float32)
    labels = span_label.reshape(-1).astype(jnp.int32)
    mask = seq_mask.reshape(-1).astype(jnp.float32)
    logp = jax.nn.log_softmax(logits, axis=-1)
    ce = -jnp.take_along_axis(logp, labels[:, None], axis=-1)[:, 0]
    return jnp.sum(ce * mask) / seq_mask.shape[0]


def _check(out, ref):
    out = np.asarray(jax.block_until_ready(out))
    ref = np.asarray(ref)
    assert np.allclose(out, ref, rtol=5e-5, atol=1e-4), (out, ref)


if __name__ == "__main__":
    key = jax.random.PRNGKey(0)

    # Case 1: single exact tile (B=2, S=8 -> N=128).
    k1, k2, k3, key = jax.random.split(key, 4)
    B, S = 2, 8
    logits1 = jax.random.normal(k1, (B, S, S, NUM_LABEL), dtype=jnp.float32)
    labels1 = jax.random.randint(k2, (B, S, S), 0, NUM_LABEL, dtype=jnp.int32)
    mask1 = (jax.random.uniform(k3, (B, S, S)) > 0.3).astype(jnp.float32)
    _check(span_loss(logits1, labels1, mask1), _reference(logits1, labels1, mask1))

    # Case 2: multiple tiles with the grid axis parallel (B=2, S=16 -> N=512, TN=256).
    k1, k2, k3, key = jax.random.split(key, 4)
    B, S = 2, 16
    logits2 = jax.random.normal(k1, (B, S, S, NUM_LABEL), dtype=jnp.float32)
    labels2 = jax.random.randint(k2, (B, S, S), 0, NUM_LABEL, dtype=jnp.int32)
    mask2 = (jax.random.uniform(k3, (B, S, S)) > 0.5).astype(jnp.float32)
    _check(span_loss(logits2, labels2, mask2, tn=256),
           _reference(logits2, labels2, mask2))

    # Case 3: ragged tile (N=288 not a multiple of 128) masked in-kernel, no pad.
    k1, k2, k3, key = jax.random.split(key, 4)
    B, S = 2, 12
    logits3 = jax.random.normal(k1, (B, S, S, NUM_LABEL), dtype=jnp.float32)
    labels3 = jax.random.randint(k2, (B, S, S), 0, NUM_LABEL, dtype=jnp.int32)
    mask3 = (jax.random.uniform(k3, (B, S, S)) > 0.3).astype(jnp.float32)
    _check(span_loss(logits3, labels3, mask3), _reference(logits3, labels3, mask3))

    print("KERNEL_OK")
</pallas_src>

<mosaic_0001>
module attributes {stable_mosaic.version = 11 : i64} {
  func.func @_span_loss_kernel(%arg0: i32, %arg1: memref<10x128xf32, #tpu.memory_space<vmem>>, %arg2: memref<1x128xi32, #tpu.memory_space<vmem>>, %arg3: memref<1x128xf32, #tpu.memory_space<vmem>>, %arg4: memref<1x1x128xf32, #tpu.memory_space<vmem>>) attributes {dimension_semantics = [#tpu.dimension_semantics<parallel>], iteration_bounds = array<i64: 1>, scalar_prefetch = 0 : i64, scratch_operands = 0 : i64, tpu.core_type = #tpu.core_type<tc>, window_params = [{transform_indices = @transform_0, window_bounds = array<i64: 10, 128>}, {transform_indices = @transform_1, window_bounds = array<i64: 1, 128>}, {transform_indices = @transform_2, window_bounds = array<i64: 1, 128>}, {transform_indices = @transform_3, window_bounds = array<i64: 1, 1, 128>}]} {
    %c0 = arith.constant 0 : index
    %c0_0 = arith.constant 0 : index
    %0 = vector.load %arg1[%c0, %c0_0] : memref<10x128xf32, #tpu.memory_space<vmem>>, vector<10x128xf32>
    %c0_1 = arith.constant 0 : index
    %c0_2 = arith.constant 0 : index
    %1 = vector.load %arg2[%c0_1, %c0_2] : memref<1x128xi32, #tpu.memory_space<vmem>>, vector<1x128xi32>
    %c0_3 = arith.constant 0 : index
    %c0_4 = arith.constant 0 : index
    %2 = vector.load %arg3[%c0_3, %c0_4] : memref<1x128xf32, #tpu.memory_space<vmem>>, vector<1x128xf32>
    %3 = tpu.iota {dimensions = array<i32: 1>} : vector<1x128xi32>
    %c128_i32 = arith.constant 128 : i32
    %4 = arith.muli %arg0, %c128_i32 : i32
    %5 = vector.broadcast %4 : i32 to vector<1x128xi32>
    %6 = arith.addi %3, %5 : vector<1x128xi32>
    %c128_i32_5 = arith.constant 128 : i32
    %7 = vector.broadcast %c128_i32_5 : i32 to vector<1x128xi32>
    %8 = arith.cmpi slt, %6, %7 : vector<1x128xi32>
    %cst = arith.constant dense<0xFF800000> : vector<128xf32>
    %9 = vector.multi_reduction <maximumf>, %0, %cst [0] : vector<10x128xf32> to vector<128xf32>
    %10 = vector.shape_cast %9 : vector<128xf32> to vector<1x128xf32>
    %11 = vector.broadcast %10 : vector<1x128xf32> to vector<10x128xf32>
    %12 = arith.subf %0, %11 : vector<10x128xf32>
    %13 = math.exp %12 : vector<10x128xf32>
    %cst_6 = arith.constant dense<0.000000e+00> : vector<128xf32>
    %14 = vector.multi_reduction <add>, %13, %cst_6 [0] : vector<10x128xf32> to vector<128xf32>
    %15 = vector.shape_cast %14 : vector<128xf32> to vector<1x128xf32>
    %16 = math.log %15 : vector<1x128xf32>
    %17 = arith.addf %16, %10 : vector<1x128xf32>
    %18 = tpu.iota {dimensions = array<i32: 0>} : vector<10x128xi32>
    %19 = vector.broadcast %1 : vector<1x128xi32> to vector<10x128xi32>
    %20 = arith.cmpi eq, %18, %19 : vector<10x128xi32>
    %21 = arith.extui %20 : vector<10x128xi1> to vector<10x128xi32>
    %22 = arith.sitofp %21 : vector<10x128xi32> to vector<10x128xf32>
    %23 = arith.mulf %0, %22 : vector<10x128xf32>
    %cst_7 = arith.constant dense<0.000000e+00> : vector<128xf32>
    %24 = vector.multi_reduction <add>, %23, %cst_7 [0] : vector<10x128xf32> to vector<128xf32>
    %25 = vector.shape_cast %24 : vector<128xf32> to vector<1x128xf32>
    %26 = arith.subf %17, %25 : vector<1x128xf32>
    %27 = arith.mulf %26, %2 : vector<1x128xf32>
    %cst_8 = arith.constant 0.000000e+00 : f32
    %28 = vector.broadcast %cst_8 : f32 to vector<1x128xf32>
    %29 = arith.select %8, %27, %28 : vector<1x128xi1>, vector<1x128xf32>
    %30 = vector.shape_cast %29 : vector<1x128xf32> to vector<1x1x128xf32>
    %c0_9 = arith.constant 0 : index
    %c0_10 = arith.constant 0 : index
    %c0_11 = arith.constant 0 : index
    %31 = vector.load %arg4[%c0_9, %c0_10, %c0_11] : memref<1x1x128xf32, #tpu.memory_space<vmem>>, vector<1x1x128xf32>
    tpu.vector_store %arg4[%c0_9, %c0_10, %c0_11], %30 {strides = array<i32>} : memref<1x1x128xf32, #tpu.memory_space<vmem>>, vector<1x1x128xf32>,
    return
  }
  func.func @transform_0(%arg0: i32) -> (i32, i32) {
    %c0_i32 = arith.constant 0 : i32
    %c0_i32_0 = arith.constant 0 : i32
    return %c0_i32, %arg0 : i32, i32
  }
  func.func @transform_1(%arg0: i32) -> (i32, i32) {
    %c0_i32 = arith.constant 0 : i32
    %c0_i32_0 = arith.constant 0 : i32
    return %c0_i32, %arg0 : i32, i32
  }
  func.func @transform_2(%arg0: i32) -> (i32, i32) {
    %c0_i32 = arith.constant 0 : i32
    %c0_i32_0 = arith.constant 0 : i32
    return %c0_i32, %arg0 : i32, i32
  }
  func.func @transform_3(%arg0: i32) -> (i32, i32, i32) {
    %c0_i32 = arith.constant 0 : i32
    %c0_i32_0 = arith.constant 0 : i32
    %c0_i32_1 = arith.constant 0 : i32
    return %arg0, %c0_i32, %c0_i32_0 : i32, i32, i32
  }
}

</mosaic_0001>

<llo_original>
// kernel: span_loss.1
$region0: #{span_loss.1}
  #allocation0 [shape = 'u32[]', space=smem, size = 0x4, offset = 0x4, fixed_abs, tag = 'smem constant byte address 0x4 - core index']
  #allocation1 [shape = 'u32[144,128]{1,0:T(1,128)}', space=vmem, size = 0x12000, scoped, tag = 'internal scratch']
  %s0 = inlined_call_operand.vmem [shape: f32[10,128], index: 0, kind: input, shape index: {}]
  %s1 = inlined_call_operand.vmem [shape: s32[1,128], index: 1, kind: input, shape index: {}]
  %s2 = inlined_call_operand.vmem [shape: f32[1,128], index: 2, kind: input, shape index: {}]
  %s3 = inlined_call_operand.vmem [shape: f32[1,1,128], index: 3, kind: output, shape index: {}]
  %s4 = sld [smem:[#allocation0]]
  $region22: #{span_loss.1} parent=0
    _
  %s6 = ssub.s32 1, %s4
  %s7 = scalar_select 0, %s6, %s4
  // Predicated region
  $region2: #{span_loss.1} parent=0 // pred_check
    _
  $region3: #{span_loss.1} parent=0 // pred_check_branch
    %9 = sbr.rel (0) target = $region5
  $region4: #{span_loss.1} parent=0 // pred_region
    _
  $region5: #{span_loss.1} parent=0 // pred_fallthru
    _
  // Predicated region
  $region6: #{span_loss.1} parent=0 // pred_check
    _
  $region7: #{span_loss.1} parent=0 // pred_check_branch
    %11 = sbr.rel (0) target = $region9
  $region8: #{span_loss.1} parent=0 // pred_region
    _
  $region9: #{span_loss.1} parent=0 // pred_fallthru
    _
  // Predicated region
  $region10: #{span_loss.1} parent=0 // pred_check
    _
  $region11: #{span_loss.1} parent=0 // pred_check_branch
    %13 = sbr.rel (0) target = $region13
  $region12: #{span_loss.1} parent=0 // pred_region
    _
  $region13: #{span_loss.1} parent=0 // pred_fallthru
    _
  %v14 = vld [vmem:[%s0] sm:$0xff]
  %v15 = vld [vmem:[%s0 + $0x8] sm:$0x3]
  %v16 = vld [vmem:[%s1] sm:$0x1]
  %v17 = vld [vmem:[%s2] sm:$0x1]
  %v18 = vlaneseq
  %v19 = vand.u32 %v18, 127
  %s20 = smul.u32 0, 128
  %v21 = vstv %s20
  %v22 = vadd.s32 %v19, %v21
  %vm23 = vcmp.lt.s32.totalorder %v22, 128
  %vm24 = vcmask 1041408
  %v25 = vsel %vm24, %v15, -inf
  %v26 = vmax.f32 %v14, %v25
  %v27 = vrot.slane %v26, 4
  %v28 = vmax.f32 %v26, %v27
  %v29 = vrot.slane %v28, 2
  %v30 = vmax.f32 %v28, %v29
  %v31 = vrot.slane %v30, 1
  %v32 = vmax.f32 %v30, %v31
  %v33 = vsub.f32 %v14, %v32
  %v34 = vsub.f32 %v15, %v32
  %v35 = vmul.f32 %v33, 1.442695
  %v36 = vpow.pop %v35
  %v37 = vmul.f32 %v34, 1.442695
  %v38 = vpow.pop %v37
  %v39 = vsel %vm24, %v38, 0.0
  %v40 = vadd.f32 %v36, %v39
  %v41 = vrot.slane %v40, 4
  %v42 = vadd.f32 %v40, %v41
  %v43 = vrot.slane %v42, 2
  %v44 = vadd.f32 %v42, %v43
  %v45 = vrot.slane %v44, 1
  %v46 = vadd.f32 %v44, %v45
  %v47 = vlog2.pop %v46
  %v48 = vmul.f32 %v47, 0.6931472
  %v49 = vadd.f32 %v48, %v32
  %v50 = vlaneseq
  %v51 = vshrl.u32 %v50, 7
  %v52 = vadd.s32 %v51, 8
  %v53 = vlaneseq
  %v54 = vshrl.u32 %v53, 7
  %v55 = vsub.s32 0, %v54
  %v56 = vrot.slane %v16, %v55
  %vm57 = vcmp.eq.s32.totalorder %v51, %v56
  %vm58 = vcmp.eq.s32.totalorder %v52, %v56
  %v59 = vsel %vm57, 1, 0
  %v60 = vsel %vm58, 1, 0
  %v61 = vcvt.s32.f32 %v59
  %v62 = vcvt.s32.f32 %v60
  %v63 = vmul.f32 %v14, %v61
  %v64 = vmul.f32 %v15, %v62
  %v65 = vsel %vm24, %v64, 0.0
  %v66 = vadd.f32 %v63, %v65
  %v67 = vrot.slane %v66, 4
  %v68 = vadd.f32 %v66, %v67
  %v69 = vrot.slane %v68, 2
  %v70 = vadd.f32 %v68, %v69
  %v71 = vrot.slane %v70, 1
  %v72 = vadd.f32 %v70, %v71
  %v73 = vsub.f32 %v49, %v72
  %v74 = vmul.f32 %v73, %v17
  %v75 = vsel %vm23, %v74, 0.0
  %76 = vst [vmem:[%s3] sm:$0x1] %v75
  // Predicated region
  $region14: #{span_loss.1} parent=0 // pred_check
    _
  $region15: #{span_loss.1} parent=0 // pred_check_branch
    %78 = sbr.rel (0) target = $region17
  $region16: #{span_loss.1} parent=0 // pred_region
    _
  $region17: #{span_loss.1} parent=0 // pred_fallthru
    _
  // Predicated region
  $region18: #{span_loss.1} parent=0 // pred_check
    _
  $region19: #{span_loss.1} parent=0 // pred_check_branch
    %80 = sbr.rel (0) target = $region21
  $region20: #{span_loss.1} parent=0 // pred_region
    _
  $region21: #{span_loss.1} parent=0 // pred_fallthru
    _

</llo_original>
